<compile_context>
chip_gen: v6e
topology: v6e:2x2x1
jax: 0.10.0
libtpu: 0.0.40
codegen_flags: <defaults>
</compile_context>

<pallas_src>
import functools
import math

import numpy as np
import jax
import jax.numpy as jnp
from jax.experimental import pallas as pl
from jax.experimental.pallas import tpu as pltpu

KE = 14.3996  # Coulomb constant, same value as the torch 'ke' buffer.

# contract the last (lane) dim of both operands: A (r, P) @ B (m, P)^T -> (r, m)
_NT_DIMS = (((1,), (1,)), ((), ()))


def _erfc(x):
    """Abramowitz & Stegun 7.1.26 erfc approximation (|err| < 1.5e-7, x >= 0).

    Used instead of lax.erf inside the kernel (guaranteed Mosaic lowering);
    the same function is used on the pure-JAX gradient path for consistency.
    """
    p = 0.3275911
    a1, a2, a3, a4, a5 = (0.254829592, -0.284496736, 1.421413741,
                          -1.453152027, 1.061405429)
    t = 1.0 / (1.0 + p * x)
    poly = t * (a1 + t * (a2 + t * (a3 + t * (a4 + t * a5))))
    return poly * jnp.exp(-x * x)


def _round_up(x, m):
    return ((x + m - 1) // m) * m


def _pad2d(a, rows, cols, fill):
    r_extra = rows - a.shape[0]
    c_extra = cols - a.shape[1]
    if r_extra == 0 and c_extra == 0:
        return a
    return jnp.pad(a, ((0, r_extra), (0, c_extra)), constant_values=fill)


# ----------------------------- Pallas kernels --------------------------------
def _pair_kernel(m_pad, sqrt_alpha, cutoff, f_r_cutoff,
                 rij_ref, qq_ref, b_ref, n_ref, ccut_ref, mol_ref, out_ref):
    """Real-space Ewald + Born pair energies, reduced per molecule on the MXU.

    Lane-major: rij_ref (3, T); qq/b/n/ccut/mol (1, T); out_ref (8, m_pad)
    with row 0 = screened-Coulomb sum, row 1 = Born sum (rows 2..7 zero).
    The grid axis runs over pair tiles; out_ref accumulates across it.
    """
    t = pl.program_id(0)
    rx = rij_ref[0:1, :]
    ry = rij_ref[1:2, :]
    rz = rij_ref[2:3, :]
    d = jnp.sqrt(rx * rx + ry * ry + rz * rz)                      # (1, T)

    f_r = _erfc(sqrt_alpha * d) / d
    pot = qq_ref[...] * (f_r - f_r_cutoff)
    # position-independent Born factors precomputed outside the kernel
    born = b_ref[...] * (jnp.exp(-n_ref[...] * jnp.log(d)) - ccut_ref[...])

    mask = (d < cutoff).astype(jnp.float32)
    pot = pot * mask
    born = born * mask

    tile = pot.shape[1]
    # Build an 8-row LHS (rows >= 2 zero) without a sublane concat.
    row = jax.lax.broadcasted_iota(jnp.int32, (8, tile), 0)
    stacked = jnp.where(row == 0, pot, 0.0) + jnp.where(row == 1, born, 0.0)

    mol_ids = jax.lax.broadcasted_iota(jnp.int32, (m_pad, tile), 0)
    sel = (mol_ref[...] == mol_ids).astype(jnp.float32)            # (m_pad, T)

    psum = jax.lax.dot_general(stacked, sel, _NT_DIMS,
                               precision=jax.lax.Precision.HIGHEST,
                               preferred_element_type=jnp.float32)  # (8, m_pad)

    @pl.when(t == 0)
    def _():
        out_ref[...] = jnp.zeros_like(out_ref)

    out_ref[...] += psum


def _recip_kernel(m_pad, pos_ref, kax_ref, kay_ref, kaz_ref, q_ref, mol_ref,
                  qr_ref, qi_ref):
    """Ewald structure factors with per-atom k-vectors (gathered outside).

    Lane-major: pos_ref (3, T); kax/kay/kaz (K_pad, T); q/mol (1, T).
    Outputs qr/qi (m_pad, K_pad) accumulate over the atom-tile grid axis.
    The charge-weighted per-molecule reduction is a one-hot matmul on the MXU.
    """
    t = pl.program_id(0)
    px = pos_ref[0:1, :]
    py = pos_ref[1:2, :]
    pz = pos_ref[2:3, :]
    phase = px * kax_ref[...] + py * kay_ref[...] + pz * kaz_ref[...]  # (K, T)

    tile = phase.shape[1]
    mol_ids = jax.lax.broadcasted_iota(jnp.int32, (m_pad, tile), 0)
    w = jnp.where(mol_ref[...] == mol_ids, q_ref[...], 0.0)            # (M, T)

    pr = jax.lax.dot_general(w, jnp.cos(phase), _NT_DIMS,
                             precision=jax.lax.Precision.HIGHEST,
                             preferred_element_type=jnp.float32)       # (M, K)
    pi = jax.lax.dot_general(w, jnp.sin(phase), _NT_DIMS,
                             precision=jax.lax.Precision.HIGHEST,
                             preferred_element_type=jnp.float32)

    @pl.when(t == 0)
    def _():
        qr_ref[...] = jnp.zeros_like(qr_ref)
        qi_ref[...] = jnp.zeros_like(qi_ref)

    qr_ref[...] += pr
    qi_ref[...] += pi


# ----------------------------- Pallas wrappers --------------------------------
def _pair_energies_pallas(r_ij, qq_ij, b_ij, n_ij, ccut_ij, mol_pair, n_mol,
                          sqrt_alpha, cutoff, f_r_cutoff):
    p = r_ij.shape[0]
    tile_p = min(2048, _round_up(max(p, 1), 128))
    p_pad = _round_up(max(p, 1), tile_p)
    m_pad = max(8, _round_up(n_mol, 8))

    # padded pairs: d = 2*cutoff*sqrt(3) > cutoff, qq = b = 0, mol = -1
    rij_t = _pad2d(jnp.transpose(r_ij).astype(jnp.float32), 3, p_pad,
                   2.0 * cutoff)
    qq_row = _pad2d(qq_ij.reshape(1, -1).astype(jnp.float32), 1, p_pad, 0.0)
    b_row = _pad2d(b_ij.reshape(1, -1).astype(jnp.float32), 1, p_pad, 0.0)
    n_row = _pad2d(n_ij.reshape(1, -1).astype(jnp.float32), 1, p_pad, 1.0)
    c_row = _pad2d(ccut_ij.reshape(1, -1).astype(jnp.float32), 1, p_pad, 1.0)
    mol_row = _pad2d(mol_pair.reshape(1, -1).astype(jnp.int32), 1, p_pad, -1)

    kernel = functools.partial(_pair_kernel, m_pad, sqrt_alpha, cutoff,
                               f_r_cutoff)
    out = pl.pallas_call(
        kernel,
        out_shape=jax.ShapeDtypeStruct((8, m_pad), jnp.float32),
        grid=(p_pad // tile_p,),
        in_specs=[
            pl.BlockSpec((3, tile_p), lambda t: (0, t)),
            pl.BlockSpec((1, tile_p), lambda t: (0, t)),
            pl.BlockSpec((1, tile_p), lambda t: (0, t)),
            pl.BlockSpec((1, tile_p), lambda t: (0, t)),
            pl.BlockSpec((1, tile_p), lambda t: (0, t)),
            pl.BlockSpec((1, tile_p), lambda t: (0, t)),
        ],
        out_specs=pl.BlockSpec((8, m_pad), lambda t: (0, 0)),
        compiler_params=pltpu.CompilerParams(
            dimension_semantics=("arbitrary",),   # reduction axis (accumulator)
            vmem_limit_bytes=32 * 1024 * 1024),
    )(rij_t, qq_row, b_row, n_row, c_row, mol_row)
    return out[0, :n_mol], out[1, :n_mol]


def _structure_factors_pallas(positions, q, idx_m, kvecs_m, n_mol):
    n = positions.shape[0]
    n_k = kvecs_m.shape[1]
    tile_n = min(512, _round_up(max(n, 1), 128))
    n_pad = _round_up(max(n, 1), tile_n)
    k_pad = _round_up(n_k, 128)
    m_pad = max(8, _round_up(n_mol, 8))

    # per-atom k-vector gather (so cos/sin count is N*K, not N*M*K)
    kvec_atom = jnp.take(kvecs_m, idx_m, axis=0)                  # (N, K, 3)
    kax = _pad2d(jnp.transpose(kvec_atom[:, :, 0]), k_pad, n_pad, 0.0)
    kay = _pad2d(jnp.transpose(kvec_atom[:, :, 1]), k_pad, n_pad, 0.0)
    kaz = _pad2d(jnp.transpose(kvec_atom[:, :, 2]), k_pad, n_pad, 0.0)
    pos_t = _pad2d(jnp.transpose(positions).astype(jnp.float32), 3, n_pad, 0.0)
    q_row = _pad2d(q.reshape(1, -1).astype(jnp.float32), 1, n_pad, 0.0)
    mol_row = _pad2d(idx_m.reshape(1, -1).astype(jnp.int32), 1, n_pad, -1)

    kernel = functools.partial(_recip_kernel, m_pad)
    qr, qi = pl.pallas_call(
        kernel,
        out_shape=(jax.ShapeDtypeStruct((m_pad, k_pad), jnp.float32),
                   jax.ShapeDtypeStruct((m_pad, k_pad), jnp.float32)),
        grid=(n_pad // tile_n,),
        in_specs=[
            pl.BlockSpec((3, tile_n), lambda t: (0, t)),
            pl.BlockSpec((k_pad, tile_n), lambda t: (0, t)),
            pl.BlockSpec((k_pad, tile_n), lambda t: (0, t)),
            pl.BlockSpec((k_pad, tile_n), lambda t: (0, t)),
            pl.BlockSpec((1, tile_n), lambda t: (0, t)),
            pl.BlockSpec((1, tile_n), lambda t: (0, t)),
        ],
        out_specs=(pl.BlockSpec((m_pad, k_pad), lambda t: (0, 0)),
                   pl.BlockSpec((m_pad, k_pad), lambda t: (0, 0))),
        compiler_params=pltpu.CompilerParams(
            dimension_semantics=("arbitrary",),
            vmem_limit_bytes=32 * 1024 * 1024),
    )(pos_t, kax, kay, kaz, q_row, mol_row)
    return qr[:n_mol, :n_k], qi[:n_mol, :n_k]


# ------------------------------- the module -----------------------------------
class IonicPotentialPallas:
    """Pallas/TPU port of OgreInterface IonicPotential.forward."""

    def __init__(self, alpha, k_max, cutoff):
        self.ke = KE
        self.alpha = float(alpha)
        self.cutoff = float(cutoff)
        self.k_max = int(k_max)
        self.kvecs = self._generate_kvecs()          # (K, 3) float32, numpy

    def _generate_kvecs(self):
        krange = np.arange(0, self.k_max + 1, dtype=np.float32)
        krange = np.concatenate([krange, -krange[1:]])
        kvecs = np.array([(a, b, 0.0) for a in krange for b in krange],
                         dtype=np.float32)
        norm = np.sum(kvecs ** 2, axis=1)
        keep = norm <= self.k_max ** 2 + 2
        kvecs, norm = kvecs[keep], norm[keep]
        return kvecs[norm != 0]

    def forward(self, inputs, r0_dict, ns_dict, z_shift=False, check=False):
        z_str = "_z" if z_shift else ""

        # ------------------ glue: unpack / host-side prep --------------------
        q = jnp.asarray(inputs["partial_charges"], jnp.float32).squeeze(-1)
        idx_m_np = np.asarray(inputs["idx_m"], np.int32)
        idx_i_np = np.asarray(inputs["idx_i"], np.int32)
        idx_j_np = np.asarray(inputs["idx_j"], np.int32)
        z_np = np.asarray(inputs["Z"], np.int64)
        is_film_np = np.asarray(inputs["is_film"], np.int64)
        cell = jnp.asarray(inputs["cell"], jnp.float32)
        offsets = jnp.asarray(inputs["offsets"], jnp.float32)
        r_pos = jnp.asarray(inputs[f"R{z_str}"], jnp.float32)
        shift = jnp.asarray(inputs["shift"], jnp.float32)

        idx_m = jnp.asarray(idx_m_np)
        idx_i = jnp.asarray(idx_i_np)
        idx_j = jnp.asarray(idx_j_np)
        is_film_f = jnp.asarray(is_film_np, jnp.float32)

        n_molecules = int(idx_m_np[-1]) + 1

        # repeat_interleave(shift, n_atoms) == shift[idx_m]; substrate rows
        # zeroed (torch: shifts[is_sub_bool] *= 0.0).
        shifts = shift[idx_m] * is_film_f[:, None]
        r_shift = r_pos + shifts

        # Born parameters: dict lookups only for UNIQUE keys (matches torch
        # semantics), then a vectorized gather — no O(P) Python loop.
        fi = is_film_np[idx_i_np]
        fj = is_film_np[idx_j_np]
        zi = z_np[idx_i_np]
        zj = z_np[idx_j_np]
        keys4 = np.stack([fi, fj, zi, zj], axis=1).astype(np.int64)
        uniq4, inv4 = np.unique(keys4, axis=0, return_inverse=True)
        inv4 = np.asarray(inv4).reshape(-1)
        r0_vals = np.asarray(
            [r0_dict[tuple(int(v) for v in k)] for k in uniq4], np.float32)
        r0_ij = jnp.asarray(r0_vals[inv4])
        uniq2, inv2 = np.unique(keys4[:, 2:], axis=0, return_inverse=True)
        inv2 = np.asarray(inv2).reshape(-1)
        n_vals = np.asarray(
            [ns_dict[(int(k[0]), int(k[1]))] for k in uniq2], np.float32)
        n_ij = jnp.asarray(n_vals[inv2])

        qq_ij = q[idx_i] * q[idx_j]
        # position-independent Born factors, hoisted out of the kernel
        b_ij = jnp.abs(qq_ij) * r0_ij ** (n_ij - 1.0) / n_ij
        ccut_ij = self.cutoff ** (-n_ij)
        mol_pair = idx_m[idx_i]

        sqrt_alpha = math.sqrt(self.alpha)
        f_r_cutoff = math.erfc(sqrt_alpha * self.cutoff) / self.cutoff

        r_ij = r_shift[idx_j] - r_shift[idx_i] + offsets

        # ----------- Pallas hot path 1: pairwise real-space + Born ----------
        y_real_raw, y_born_raw = _pair_energies_pallas(
            r_ij, qq_ij, b_ij, n_ij, ccut_ij, mol_pair, n_molecules,
            sqrt_alpha, self.cutoff, f_r_cutoff)
        y_real = 0.5 * self.ke * y_real_raw
        y_born = 0.5 * self.ke * y_born_raw

        # ----------- Pallas hot path 2: Ewald reciprocal space --------------
        recip_box = 2.0 * np.pi * jnp.transpose(jnp.linalg.inv(cell), (0, 2, 1))
        v_box = jnp.abs(jnp.linalg.det(cell))
        prefactor = 2.0 * np.pi / v_box
        kvecs_m = jnp.einsum("kd,mde->mke", jnp.asarray(self.kvecs), recip_box)
        k_squared = jnp.sum(kvecs_m ** 2, axis=2)
        q_gauss = jnp.exp(-0.25 * k_squared / self.alpha)

        q_real, q_imag = _structure_factors_pallas(r_shift, q, idx_m, kvecs_m,
                                                   n_molecules)
        q_dens = q_real ** 2 + q_imag ** 2
        y_ewald = prefactor * jnp.sum(q_dens * q_gauss / k_squared, axis=1)
        self_int = jnp.sqrt(self.alpha / np.pi) * jax.ops.segment_sum(
            q ** 2, idx_m, num_segments=n_molecules)
        y_ewald = self.ke * (y_ewald - self_int)
        y_slab = self.ke * (2.0 * np.pi / v_box) * jnp.sum(q * r_shift[:, 2]) ** 2
        y_reciprocal = y_ewald + y_slab

        y_coulomb = y_real + y_reciprocal
        y_energy = y_coulomb + y_born

        # ----------- force path (torch.autograd.grad equivalent) ------------
        # TODO(synk): pallas_call is not differentiable, so the nested autograd
        # (forces + grad of film-force-norm wrt shift) is evaluated with
        # jax.grad on an identical pure-JAX energy expression.
        cutoff = self.cutoff
        ke = self.ke

        def energy_of(pos_s):
            r_vec = pos_s[idx_j] - pos_s[idx_i] + offsets
            d = jnp.sqrt(jnp.sum(r_vec ** 2, axis=1))
            f_r = _erfc(sqrt_alpha * d) / d
            pot = qq_ij * (f_r - f_r_cutoff)
            born = b_ij * (d ** (-n_ij) - ccut_ij)
            msk = (d < cutoff).astype(jnp.float32)
            e_real = 0.5 * ke * jax.ops.segment_sum(
                pot * msk, mol_pair, num_segments=n_molecules)
            e_born = 0.5 * ke * jax.ops.segment_sum(
                born * msk, mol_pair, num_segments=n_molecules)
            phase = jnp.sum(kvecs_m[idx_m] * pos_s[:, None, :], axis=2)
            qr = jax.ops.segment_sum(q[:, None] * jnp.cos(phase), idx_m,
                                     num_segments=n_molecules)
            qi = jax.ops.segment_sum(q[:, None] * jnp.sin(phase), idx_m,
                                     num_segments=n_molecules)
            e_ew = prefactor * jnp.sum((qr ** 2 + qi ** 2) * q_gauss / k_squared,
                                       axis=1)
            e_ew = ke * (e_ew - self_int)
            e_slab = ke * (2.0 * np.pi / v_box) * jnp.sum(q * pos_s[:, 2]) ** 2
            return e_real + e_born + e_ew + e_slab

        def film_norm_and_aux(shift_var):
            sh = shift_var[idx_m] * is_film_f[:, None]
            pos_s = r_pos + sh
            de_dr = jax.grad(lambda p: jnp.sum(energy_of(p)))(pos_s)
            de_dr = -de_dr * is_film_f[:, None]          # zero substrate rows
            film_force = jax.ops.segment_sum(de_dr, idx_m,
                                             num_segments=n_molecules)
            ffn = jnp.sum(film_force ** 2, axis=1)
            return jnp.sum(ffn), ffn

        film_norm_grad, film_force_norm = jax.grad(
            film_norm_and_aux, has_aux=True)(shift)
        film_force_norm = jnp.squeeze(film_force_norm)
        film_norm_grad = jnp.squeeze(film_norm_grad)

        if check:
            # Debug-only: Pallas energies vs pure-JAX reference expression.
            np.testing.assert_allclose(np.asarray(y_energy),
                                       np.asarray(energy_of(r_shift)),
                                       rtol=5e-3, atol=5e-3)

        return y_energy, y_coulomb, y_born, film_force_norm, film_norm_grad


# --------------------------------- demo ---------------------------------------
if __name__ == "__main__":
    key = jax.random.PRNGKey(0)
    k_pos, k_q, k_shift = jax.random.split(key, 3)

    n_mol = 2
    atoms_per_mol = 8
    n_atoms_total = n_mol * atoms_per_mol

    box = np.array([6.0, 6.0, 12.0], dtype=np.float32)
    cell = np.stack([np.diag(box)] * n_mol).astype(np.float32)      # (2, 3, 3)

    idx_m = np.repeat(np.arange(n_mol), atoms_per_mol).astype(np.int32)
    n_atoms_per_mol = np.full((n_mol,), atoms_per_mol, dtype=np.int32)
    z_numbers = np.tile(np.array([11, 17], dtype=np.int64), n_atoms_total // 2)
    is_film = np.tile(np.array([0, 0, 0, 0, 1, 1, 1, 1], dtype=np.int64), n_mol)

    frac = jax.random.uniform(k_pos, (n_atoms_total, 3), dtype=jnp.float32)
    positions = frac * jnp.asarray(box)

    sign = jnp.asarray(np.where(z_numbers == 11, 1.0, -1.0), jnp.float32)
    charges = sign * (0.8 + 0.4 * jax.random.uniform(
        k_q, (n_atoms_total,), dtype=jnp.float32))
    shift = 0.5 * jax.random.normal(k_shift, (n_mol, 3), dtype=jnp.float32)

    # all intra-molecule ordered pairs (i != j), zero periodic offsets
    ii, jj = [], []
    for m in range(n_mol):
        base = m * atoms_per_mol
        for a in range(atoms_per_mol):
            for b in range(atoms_per_mol):
                if a != b:
                    ii.append(base + a)
                    jj.append(base + b)
    idx_i = np.asarray(ii, np.int32)
    idx_j = np.asarray(jj, np.int32)
    offsets = np.zeros((idx_i.shape[0], 3), np.float32)

    # deterministic Born parameter tables (synthetic, covers all present keys)
    radii = {11: 1.16, 17: 1.67}
    r0_dict, ns_dict = {}, {}
    for zi in (11, 17):
        for zj in (11, 17):
            ns_dict[(zi, zj)] = 6.0 + 0.5 * (float(zi == 17) + float(zj == 17))
            for fi in (0, 1):
                for fj in (0, 1):
                    r0_dict[(fi, fj, zi, zj)] = (radii[zi] + radii[zj]
                                                 + 0.05 * (fi + fj))

    inputs = {
        "partial_charges": charges[:, None],
        "idx_m": idx_m,
        "cell": cell,
        "Z": z_numbers,
        "idx_i": idx_i,
        "idx_j": idx_j,
        "is_film": is_film,
        "R": positions,
        "shift": shift,
        "n_atoms": n_atoms_per_mol,
        "offsets": offsets,
    }

    module = IonicPotentialPallas(alpha=0.3, k_max=3, cutoff=6.0)
    outs = module.forward(inputs, r0_dict, ns_dict, z_shift=False, check=True)
    for o in outs:
        jax.block_until_ready(o)
    print("KERNEL_OK")
</pallas_src>

<mosaic_0001>
module attributes {stable_mosaic.version = 11 : i64} {
  func.func @_pair_kernel(%arg0: i32, %arg1: memref<3x128xf32, #tpu.memory_space<vmem>>, %arg2: memref<1x128xf32, #tpu.memory_space<vmem>>, %arg3: memref<1x128xf32, #tpu.memory_space<vmem>>, %arg4: memref<1x128xf32, #tpu.memory_space<vmem>>, %arg5: memref<1x128xf32, #tpu.memory_space<vmem>>, %arg6: memref<1x128xi32, #tpu.memory_space<vmem>>, %arg7: memref<8x8xf32, #tpu.memory_space<vmem>>) attributes {dimension_semantics = [#tpu.dimension_semantics<arbitrary>], iteration_bounds = array<i64: 1>, scalar_prefetch = 0 : i64, scratch_operands = 0 : i64, tpu.core_type = #tpu.core_type<tc>, window_params = [{transform_indices = @transform_0, window_bounds = array<i64: 3, 128>}, {transform_indices = @transform_1, window_bounds = array<i64: 1, 128>}, {transform_indices = @transform_2, window_bounds = array<i64: 1, 128>}, {transform_indices = @transform_3, window_bounds = array<i64: 1, 128>}, {transform_indices = @transform_4, window_bounds = array<i64: 1, 128>}, {transform_indices = @transform_5, window_bounds = array<i64: 1, 128>}, {pipeline_mode = #tpu.pipeline_mode<synchronous>, transform_indices = @transform_6, window_bounds = array<i64: 8, 8>}]} {
    %c0 = arith.constant 0 : index
    %c0_0 = arith.constant 0 : index
    %0 = vector.load %arg1[%c0, %c0_0] : memref<3x128xf32, #tpu.memory_space<vmem>>, vector<1x128xf32>
    %c1 = arith.constant 1 : index
    %c0_1 = arith.constant 0 : index
    %1 = vector.load %arg1[%c1, %c0_1] : memref<3x128xf32, #tpu.memory_space<vmem>>, vector<1x128xf32>
    %c2 = arith.constant 2 : index
    %c0_2 = arith.constant 0 : index
    %2 = vector.load %arg1[%c2, %c0_2] : memref<3x128xf32, #tpu.memory_space<vmem>>, vector<1x128xf32>
    %3 = arith.mulf %0, %0 : vector<1x128xf32>
    %4 = arith.mulf %1, %1 : vector<1x128xf32>
    %5 = arith.addf %3, %4 : vector<1x128xf32>
    %6 = arith.mulf %2, %2 : vector<1x128xf32>
    %7 = arith.addf %5, %6 : vector<1x128xf32>
    %8 = math.sqrt %7 : vector<1x128xf32>
    %cst = arith.constant 0.547722578 : f32
    %9 = vector.broadcast %cst : f32 to vector<1x128xf32>
    %10 = arith.mulf %9, %8 : vector<1x128xf32>
    %cst_3 = arith.constant 0.327591091 : f32
    %11 = vector.broadcast %cst_3 : f32 to vector<1x128xf32>
    %12 = arith.mulf %11, %10 : vector<1x128xf32>
    %cst_4 = arith.constant 1.000000e+00 : f32
    %13 = vector.broadcast %cst_4 : f32 to vector<1x128xf32>
    %14 = arith.addf %13, %12 : vector<1x128xf32>
    %cst_5 = arith.constant 1.000000e+00 : f32
    %15 = vector.broadcast %cst_5 : f32 to vector<1x128xf32>
    %16 = arith.divf %15, %14 : vector<1x128xf32>
    %cst_6 = arith.constant 1.06140542 : f32
    %17 = vector.broadcast %cst_6 : f32 to vector<1x128xf32>
    %18 = arith.mulf %16, %17 : vector<1x128xf32>
    %cst_7 = arith.constant -1.45315206 : f32
    %19 = vector.broadcast %cst_7 : f32 to vector<1x128xf32>
    %20 = arith.addf %19, %18 : vector<1x128xf32>
    %21 = arith.mulf %16, %20 : vector<1x128xf32>
    %cst_8 = arith.constant 1.42141378 : f32
    %22 = vector.broadcast %cst_8 : f32 to vector<1x128xf32>
    %23 = arith.addf %22, %21 : vector<1x128xf32>
    %24 = arith.mulf %16, %23 : vector<1x128xf32>
    %cst_9 = arith.constant -0.284496725 : f32
    %25 = vector.broadcast %cst_9 : f32 to vector<1x128xf32>
    %26 = arith.addf %25, %24 : vector<1x128xf32>
    %27 = arith.mulf %16, %26 : vector<1x128xf32>
    %cst_10 = arith.constant 0.254829586 : f32
    %28 = vector.broadcast %cst_10 : f32 to vector<1x128xf32>
    %29 = arith.addf %28, %27 : vector<1x128xf32>
    %30 = arith.mulf %16, %29 : vector<1x128xf32>
    %cst_11 = arith.constant 0.000000e+00 : f32
    %31 = vector.broadcast %cst_11 : f32 to vector<1x128xf32>
    %32 = arith.subf %31, %10 : vector<1x128xf32>
    %33 = arith.mulf %32, %10 : vector<1x128xf32>
    %34 = math.exp %33 : vector<1x128xf32>
    %35 = arith.mulf %30, %34 : vector<1x128xf32>
    %36 = arith.divf %35, %8 : vector<1x128xf32>
    %c0_12 = arith.constant 0 : index
    %c0_13 = arith.constant 0 : index
    %37 = vector.load %arg2[%c0_12, %c0_13] : memref<1x128xf32, #tpu.memory_space<vmem>>, vector<1x128xf32>
    %cst_14 = arith.constant 5.59753062E-7 : f32
    %38 = vector.broadcast %cst_14 : f32 to vector<1x128xf32>
    %39 = arith.subf %36, %38 : vector<1x128xf32>
    %40 = arith.mulf %37, %39 : vector<1x128xf32>
    %c0_15 = arith.constant 0 : index
    %c0_16 = arith.constant 0 : index
    %41 = vector.load %arg3[%c0_15, %c0_16] : memref<1x128xf32, #tpu.memory_space<vmem>>, vector<1x128xf32>
    %c0_17 = arith.constant 0 : index
    %c0_18 = arith.constant 0 : index
    %42 = vector.load %arg4[%c0_17, %c0_18] : memref<1x128xf32, #tpu.memory_space<vmem>>, vector<1x128xf32>
    %cst_19 = arith.constant 0.000000e+00 : f32
    %43 = vector.broadcast %cst_19 : f32 to vector<1x128xf32>
    %44 = arith.subf %43, %42 : vector<1x128xf32>
    %45 = math.log %8 : vector<1x128xf32>
    %46 = arith.mulf %44, %45 : vector<1x128xf32>
    %47 = math.exp %46 : vector<1x128xf32>
    %c0_20 = arith.constant 0 : index
    %c0_21 = arith.constant 0 : index
    %48 = vector.load %arg5[%c0_20, %c0_21] : memref<1x128xf32, #tpu.memory_space<vmem>>, vector<1x128xf32>
    %49 = arith.subf %47, %48 : vector<1x128xf32>
    %50 = arith.mulf %41, %49 : vector<1x128xf32>
    %cst_22 = arith.constant 6.000000e+00 : f32
    %51 = vector.broadcast %cst_22 : f32 to vector<1x128xf32>
    %52 = arith.cmpf olt, %8, %51 : vector<1x128xf32>
    %53 = arith.extui %52 : vector<1x128xi1> to vector<1x128xi32>
    %54 = arith.sitofp %53 : vector<1x128xi32> to vector<1x128xf32>
    %55 = arith.mulf %40, %54 : vector<1x128xf32>
    %56 = arith.mulf %50, %54 : vector<1x128xf32>
    %57 = tpu.iota {dimensions = array<i32: 0>} : vector<8x128xi32>
    %c0_i32 = arith.constant 0 : i32
    %58 = vector.broadcast %c0_i32 : i32 to vector<8x128xi32>
    %59 = arith.cmpi eq, %57, %58 : vector<8x128xi32>
    %cst_23 = arith.constant 0.000000e+00 : f32
    %60 = vector.shape_cast %55 : vector<1x128xf32> to vector<1x128xf32>
    %61 = vector.broadcast %60 : vector<1x128xf32> to vector<8x128xf32>
    %62 = vector.broadcast %cst_23 : f32 to vector<8x128xf32>
    %63 = arith.select %59, %61, %62 : vector<8x128xi1>, vector<8x128xf32>
    %c1_i32 = arith.constant 1 : i32
    %64 = vector.broadcast %c1_i32 : i32 to vector<8x128xi32>
    %65 = arith.cmpi eq, %57, %64 : vector<8x128xi32>
    %cst_24 = arith.constant 0.000000e+00 : f32
    %66 = vector.shape_cast %56 : vector<1x128xf32> to vector<1x128xf32>
    %67 = vector.broadcast %66 : vector<1x128xf32> to vector<8x128xf32>
    %68 = vector.broadcast %cst_24 : f32 to vector<8x128xf32>
    %69 = arith.select %65, %67, %68 : vector<8x128xi1>, vector<8x128xf32>
    %70 = arith.addf %63, %69 : vector<8x128xf32>
    %71 = tpu.iota {dimensions = array<i32: 0>} : vector<8x128xi32>
    %c0_25 = arith.constant 0 : index
    %c0_26 = arith.constant 0 : index
    %72 = vector.load %arg6[%c0_25, %c0_26] : memref<1x128xi32, #tpu.memory_space<vmem>>, vector<1x128xi32>
    %73 = vector.broadcast %72 : vector<1x128xi32> to vector<8x128xi32>
    %74 = arith.cmpi eq, %73, %71 : vector<8x128xi32>
    %75 = arith.extui %74 : vector<8x128xi1> to vector<8x128xi32>
    %76 = arith.sitofp %75 : vector<8x128xi32> to vector<8x128xf32>
    %cst_27 = arith.constant dense<0.000000e+00> : vector<8x8xf32>
    %77 = tpu.matmul %70, %76, %cst_27 {dimension_numbers = #tpu.dot_dimension_numbers<[1], [1], [0], [0], [0, 0, 1, 0], [], []>, precision = #tpu.contract_precision<fp32>} : vector<8x128xf32>, vector<8x128xf32>, vector<8x8xf32> -> vector<8x8xf32>
    %c0_i32_28 = arith.constant 0 : i32
    %78 = arith.cmpi eq, %arg0, %c0_i32_28 : i32
    %79 = arith.extui %78 : i1 to i32
    %c0_i32_29 = arith.constant 0 : i32
    %80 = arith.cmpi ne, %79, %c0_i32_29 : i32
    scf.if %80 {
      %cst_34 = arith.constant 0.000000e+00 : f32
      %84 = vector.broadcast %cst_34 : f32 to vector<8x8xf32>
      %c0_35 = arith.constant 0 : index
      %c0_36 = arith.constant 0 : index
      %85 = vector.load %arg7[%c0_35, %c0_36] : memref<8x8xf32, #tpu.memory_space<vmem>>, vector<8x8xf32>
      tpu.vector_store %arg7[%c0_35, %c0_36], %84 {strides = array<i32>} : memref<8x8xf32, #tpu.memory_space<vmem>>, vector<8x8xf32>,
    } else {
    }
    %c0_30 = arith.constant 0 : index
    %c0_31 = arith.constant 0 : index
    %81 = vector.load %arg7[%c0_30, %c0_31] : memref<8x8xf32, #tpu.memory_space<vmem>>, vector<8x8xf32>
    %82 = arith.addf %81, %77 : vector<8x8xf32>
    %c0_32 = arith.constant 0 : index
    %c0_33 = arith.constant 0 : index
    %83 = vector.load %arg7[%c0_32, %c0_33] : memref<8x8xf32, #tpu.memory_space<vmem>>, vector<8x8xf32>
    tpu.vector_store %arg7[%c0_32, %c0_33], %82 {strides = array<i32>} : memref<8x8xf32, #tpu.memory_space<vmem>>, vector<8x8xf32>,
    return
  }
  func.func @transform_0(%arg0: i32) -> (i32, i32) {
    %c0_i32 = arith.constant 0 : i32
    %c0_i32_0 = arith.constant 0 : i32
    return %c0_i32, %arg0 : i32, i32
  }
  func.func @transform_1(%arg0: i32) -> (i32, i32) {
    %c0_i32 = arith.constant 0 : i32
    %c0_i32_0 = arith.constant 0 : i32
    return %c0_i32, %arg0 : i32, i32
  }
  func.func @transform_2(%arg0: i32) -> (i32, i32) {
    %c0_i32 = arith.constant 0 : i32
    %c0_i32_0 = arith.constant 0 : i32
    return %c0_i32, %arg0 : i32, i32
  }
  func.func @transform_3(%arg0: i32) -> (i32, i32) {
    %c0_i32 = arith.constant 0 : i32
    %c0_i32_0 = arith.constant 0 : i32
    return %c0_i32, %arg0 : i32, i32
  }
  func.func @transform_4(%arg0: i32) -> (i32, i32) {
    %c0_i32 = arith.constant 0 : i32
    %c0_i32_0 = arith.constant 0 : i32
    return %c0_i32, %arg0 : i32, i32
  }
  func.func @transform_5(%arg0: i32) -> (i32, i32) {
    %c0_i32 = arith.constant 0 : i32
    %c0_i32_0 = arith.constant 0 : i32
    return %c0_i32, %arg0 : i32, i32
  }
  func.func @transform_6(%arg0: i32) -> (i32, i32) {
    %c0_i32 = arith.constant 0 : i32
    %c0_i32_0 = arith.constant 0 : i32
    %c0_i32_1 = arith.constant 0 : i32
    return %c0_i32, %c0_i32_0 : i32, i32
  }
}

</mosaic_0001>

<llo_original>
// kernel: tpu_custom_call.1
$region0: #{tpu_custom_call.1}
  #allocation0 [shape = 'u32[]', space=smem, size = 0x4, offset = 0x4, fixed_abs, tag = 'smem constant byte address 0x4 - core index']
  #allocation1 [shape = 'u32[144,128]{1,0:T(1,128)}', space=vmem, size = 0x12000, scoped, tag = 'internal scratch']
  %s0 = inlined_call_operand.hbm [shape: f32[3,128], index: 0, kind: input, shape index: {}]
  %s1 = inlined_call_operand.vmem [shape: f32[1,128], index: 1, kind: input, shape index: {}]
  %s2 = inlined_call_operand.vmem [shape: f32[1,128], index: 2, kind: input, shape index: {}]
  %s3 = inlined_call_operand.vmem [shape: f32[1,128], index: 3, kind: input, shape index: {}]
  %s4 = inlined_call_operand.vmem [shape: f32[1,128], index: 4, kind: input, shape index: {}]
  %s5 = inlined_call_operand.vmem [shape: s32[1,128], index: 5, kind: input, shape index: {}]
  %s6 = inlined_call_operand.hbm [shape: f32[8,8], index: 6, kind: output, shape index: {}]
  %s7 = sld [smem:[#allocation0]]
  $region42: #{tpu_custom_call.1} parent=0
    _
  %s9 = ssub.s32 1, %s7
  %s10 = scalar_select 0, %s9, %s7
  $region1: #{tpu_custom_call.1} parent=0
    #allocation2 [shape = 'u8[2048]{0}', space=vmem, size = 0x800, scoped, tag = 'input window, operand 0, single buffered']
    #allocation3 [shape = 's32[1]{0}', space=sflag, size = 0x4, scoped, tag = 'scoped memory for tpu_custom_call.1']
    #allocation4 [shape = 's32[1]{0}', space=sflag, size = 0x4, scoped, tag = 'scoped memory for tpu_custom_call.1']
    #allocation5 [shape = 'u8[4096]{0}', space=vmem, size = 0x1000, scoped, tag = 'output window, operand 0, single buffered']
    %11 = vsyncpa [#allocation3], 0
    %12 = vsyncpa [#allocation4], 0
    // Predicated region
    $region2: #{tpu_custom_call.1} parent=1 // pred_check
      _
    $region3: #{tpu_custom_call.1} parent=1 // pred_check_branch
      %14 = sbr.rel (0) target = $region5
    $region4: #{tpu_custom_call.1} parent=1 // pred_region
      %s16 = ssub.s32 64, 64
      %17 = vsyncadd [#allocation3], %s16
      %s19 = sshll.u32 [#allocation2], 4
      %s20 = int_to_ptr.vmem [resolvable:$true] %s19
      %22 = dma.hbm_to_vmem [thread:$0]  %s0, 64, %s20, [#allocation3]
    $region5: #{tpu_custom_call.1} parent=1 // pred_fallthru
      _
    // Predicated region
    $region6: #{tpu_custom_call.1} parent=1 // pred_check
      _
    $region7: #{tpu_custom_call.1} parent=1 // pred_check_branch
      %24 = sbr.rel (0) target = $region9
    $region8: #{tpu_custom_call.1} parent=1 // pred_region
      _
    $region9: #{tpu_custom_call.1} parent=1 // pred_fallthru
      _
    // Predicated region
    $region10: #{tpu_custom_call.1} parent=1 // pred_check
      _
    $region11: #{tpu_custom_call.1} parent=1 // pred_check_branch
      %26 = sbr.rel (0) target = $region13
    $region12: #{tpu_custom_call.1} parent=1 // pred_region
      _
    $region13: #{tpu_custom_call.1} parent=1 // pred_fallthru
      _
    // Predicated region
    $region14: #{tpu_custom_call.1} parent=1 // pred_check
      _
    $region15: #{tpu_custom_call.1} parent=1 // pred_check_branch
      %28 = sbr.rel (0) target = $region17
    $region16: #{tpu_custom_call.1} parent=1 // pred_region
      _
    $region17: #{tpu_custom_call.1} parent=1 // pred_fallthru
      _
    // Predicated region
    $region18: #{tpu_custom_call.1} parent=1 // pred_check
      _
    $region19: #{tpu_custom_call.1} parent=1 // pred_check_branch
      %30 = sbr.rel (0) target = $region21
    $region20: #{tpu_custom_call.1} parent=1 // pred_region
      _
    $region21: #{tpu_custom_call.1} parent=1 // pred_fallthru
      _
    // Predicated region
    $region22: #{tpu_custom_call.1} parent=1 // pred_check
      _
    $region23: #{tpu_custom_call.1} parent=1 // pred_check_branch
      %32 = sbr.rel (0) target = $region25
    $region24: #{tpu_custom_call.1} parent=1 // pred_region
      _
    $region25: #{tpu_custom_call.1} parent=1 // pred_fallthru
      _
    // Predicated region
    $region26: #{tpu_custom_call.1} parent=1 // pred_check
      _
    $region27: #{tpu_custom_call.1} parent=1 // pred_check_branch
      %34 = sbr.rel (0) target = $region29
    $region28: #{tpu_custom_call.1} parent=1 // pred_region
      %35 = dma.done [#allocation3], 64
    $region29: #{tpu_custom_call.1} parent=1 // pred_fallthru
      _
    %v36 = vld [vmem:[#allocation2] sm:$0x1]
    %v37 = vld [vmem:[#allocation2 + $0x1] sm:$0x1]
    %v38 = vld [vmem:[#allocation2 + $0x2] sm:$0x1]
    %v39 = vmul.f32 %v36, %v36
    %v40 = vmul.f32 %v37, %v37
    %v41 = vadd.f32 %v39, %v40
    %v42 = vmul.f32 %v38, %v38
    %v43 = vadd.f32 %v41, %v42
    %v44 = vrsqrt.pop %v43
    %v45 = vmul.f32 %v43, %v44
    %vm46 = vcmp.eq.f32.partialorder %v43, inf
    %v47 = vsel %vm46, %v43, %v45
    %vm48 = vcmp.eq.f32.partialorder %v43, 0.0
    %v49 = vand.u32 %v43, 2147483648
    %v50 = vsel %vm48, %v49, %v47
    %v51 = vmul.f32 %v50, 0.5477226
    %v52 = vmul.f32 %v51, 0.3275911
    %v53 = vadd.f32 %v52, 1.0
    %v54 = vrcp.pop %v53
    %v55 = vmul.f32 1.0, %v54
    %v56 = vmul.f32 %v55, 1.0614054
    %v57 = vadd.f32 %v56, -1.4531521
    %v58 = vmul.f32 %v55, %v57
    %v59 = vadd.f32 %v58, 1.4214138
    %v60 = vmul.f32 %v55, %v59
    %v61 = vadd.f32 %v60, -0.28449672
    %v62 = vmul.f32 %v55, %v61
    %v63 = vadd.f32 %v62, 0.2548296
    %v64 = vmul.f32 %v55, %v63
    %v65 = vsub.f32 0.0, %v51
    %v66 = vmul.f32 %v65, %v51
    %v67 = vmul.f32 %v66, 1.442695
    %v68 = vpow.pop %v67
    %v69 = vmul.f32 %v64, %v68
    %v70 = vrcp.pop %v50
    %v71 = vmul.f32 %v69, %v70
    %v72 = vld [vmem:[%s1] sm:$0x1]
    %v73 = vsub.f32 %v71, 5.5975306e-07
    %v74 = vmul.f32 %v72, %v73
    %v75 = vld [vmem:[%s2] sm:$0x1]
    %v76 = vld [vmem:[%s3] sm:$0x1]
    %v77 = vsub.f32 0.0, %v76
    %v78 = vlog2.pop %v50
    %v79 = vmul.f32 %v78, 0.6931472
    %v80 = vmul.f32 %v77, %v79
    %v81 = vmul.f32 %v80, 1.442695
    %v82 = vpow.pop %v81
    %v83 = vld [vmem:[%s4] sm:$0x1]
    %v84 = vsub.f32 %v82, %v83
    %v85 = vmul.f32 %v75, %v84
    %vm86 = vcmp.lt.f32.partialorder %v50, 6.0
    %v87 = vsel %vm86, 1, 0
    %v88 = vcvt.s32.f32 %v87
    %v89 = vmul.f32 %v74, %v88
    %v90 = vmul.f32 %v85, %v88
    %v91 = vlaneseq
    %v92 = vshrl.u32 %v91, 7
    %vm93 = vcmp.eq.s32.totalorder %v92, 0
    %v95 = vlaneseq
    %v96 = vshrl.u32 %v95, 7
    %v97 = vsub.s32 0, %v96
    %v98 = vrot.slane %v89, %v97
    %v100 = vsel %vm93, %v98, 0.0
    %vm101 = vcmp.eq.s32.totalorder %v92, 1
    %v103 = vlaneseq
    %v104 = vshrl.u32 %v103, 7
    %v105 = vsub.s32 0, %v104
    %v106 = vrot.slane %v90, %v105
    %v108 = vsel %vm101, %v106, 0.0
    %v109 = vadd.f32 %v100, %v108
    %v110 = vld [vmem:[%s5] sm:$0x1]
    %v111 = vlaneseq
    %v112 = vshrl.u32 %v111, 7
    %v113 = vsub.s32 0, %v112
    %v114 = vrot.slane %v110, %v113
    %vm115 = vcmp.eq.s32.totalorder %v114, %v92
    %v116 = vsel %vm115, 1, 0
    %v117 = vcvt.s32.f32 %v116
    %118 = vmatprep.subr.mxu0 0.0
    %119 = vmatpush1.xpose.msra.mxu0 0.0
    %120 = vmatprep.subr.mxu0 0.0
    %121 = vmatpush1.xpose.msra.mxu0 0.0
    %122 = vmatprep.subr.mxu0 0.0
    %123 = vmatpush1.xpose.msra.mxu0 0.0
    %124 = vmatprep.subr.mxu0 0.0
    %125 = vmatpush1.xpose.msra.mxu0 0.0
    %126 = vmatprep.subr.mxu0 0.0
    %127 = vmatpush1.xpose.msra.mxu0 0.0
    %128 = vmatprep.subr.mxu0 0.0
    %129 = vmatpush1.xpose.msra.mxu0 0.0
    %130 = vmatprep.subr.mxu0 0.0
    %131 = vmatpush1.xpose.msra.mxu0 0.0
    %132 = vmatprep.subr.mxu0 0.0
    %133 = vmatpush1.xpose.msra.mxu0 0.0
    %134 = vmatprep.subr.mxu0 0.0
    %135 = vmatpush1.xpose.msra.mxu0 0.0
    %136 = vmatprep.subr.mxu0 0.0
    %137 = vmatpush1.xpose.msra.mxu0 0.0
    %138 = vmatprep.subr.mxu0 0.0
    %139 = vmatpush1.xpose.msra.mxu0 0.0
    %140 = vmatprep.subr.mxu0 0.0
    %141 = vmatpush1.xpose.msra.mxu0 0.0
    %142 = vmatprep.subr.mxu0 0.0
    %143 = vmatpush1.xpose.msra.mxu0 0.0
    %144 = vmatprep.subr.mxu0 0.0
    %145 = vmatpush1.xpose.msra.mxu0 0.0
    %146 = vmatprep.subr.mxu0 0.0
    %147 = vmatpush1.xpose.msra.mxu0 0.0
    %148 = vmatprep.subr.mxu0 0.0
    %v149 = vand.u32 %v117, 4294901760
    %150 = vmatpush1.xpose.msra.mxu0 %v149
    %151 = vmatprep.subr.mxu0 0.0
    %152 = vmatpush2.xpose.msra.mxu0 0.0
    %153 = vmatprep.subr.mxu0 0.0
    %154 = vmatpush2.xpose.msra.mxu0 0.0
    %155 = vmatprep.subr.mxu0 0.0
    %156 = vmatpush2.xpose.msra.mxu0 0.0
    %157 = vmatprep.subr.mxu0 0.0
    %158 = vmatpush2.xpose.msra.mxu0 0.0
    %159 = vmatprep.subr.mxu0 0.0
    %160 = vmatpush2.xpose.msra.mxu0 0.0
    %161 = vmatprep.subr.mxu0 0.0
    %162 = vmatpush2.xpose.msra.mxu0 0.0
    %163 = vmatprep.subr.mxu0 0.0
    %164 = vmatpush2.xpose.msra.mxu0 0.0
    %165 = vmatprep.subr.mxu0 0.0
    %166 = vmatpush2.xpose.msra.mxu0 0.0
    %167 = vmatprep.subr.mxu0 0.0
    %168 = vmatpush2.xpose.msra.mxu0 0.0
    %169 = vmatprep.subr.mxu0 0.0
    %170 = vmatpush2.xpose.msra.mxu0 0.0
    %171 = vmatprep.subr.mxu0 0.0
    %172 = vmatpush2.xpose.msra.mxu0 0.0
    %173 = vmatprep.subr.mxu0 0.0
    %174 = vmatpush2.xpose.msra.mxu0 0.0
    %175 = vmatprep.subr.mxu0 0.0
    %176 = vmatpush2.xpose.msra.mxu0 0.0
    %177 = vmatprep.subr.mxu0 0.0
    %178 = vmatpush2.xpose.msra.mxu0 0.0
    %179 = vmatprep.subr.mxu0 0.0
    %180 = vmatpush2.xpose.msra.mxu0 0.0
    %181 = vmatprep.subr.mxu0 0.0
    %182 = vmatpush2.xpose.msra.mxu0 0.0
    %183 = vmatprep.mubr.f32.mxu0 0.0
    %v184 = vand.u32 %v109, 4294901760
    %v185 = vsub.f32 %v109, %v184
    %v186 = vand.u32 %v185, 4294901760
    %v187 = vsub.f32 %v185, %v186
    %v188 = vand.u32 %v187, 4294901760
    %189 = vmatmul.mubr.f32.gmra.mxu0 %v188
    %v190 = vpop.f32.mrf.mxu0
    %v191 = vadd.f32 0.0, %v190
    %v192 = vpop.f32.mrf.mxu0
    %193 = vdwg.mxu0
    %194 = vmatprep.subr.mxu0 0.0
    %195 = vmatpush1.xpose.msra.mxu0 0.0
    %196 = vmatprep.subr.mxu0 0.0
    %197 = vmatpush1.xpose.msra.mxu0 0.0
    %198 = vmatprep.subr.mxu0 0.0
    %199 = vmatpush1.xpose.msra.mxu0 0.0
    %200 = vmatprep.subr.mxu0 0.0
    %201 = vmatpush1.xpose.msra.mxu0 0.0
    %202 = vmatprep.subr.mxu0 0.0
    %203 = vmatpush1.xpose.msra.mxu0 0.0
    %204 = vmatprep.subr.mxu0 0.0
    %205 = vmatpush1.xpose.msra.mxu0 0.0
    %206 = vmatprep.subr.mxu0 0.0
    %207 = vmatpush1.xpose.msra.mxu0 0.0
    %208 = vmatprep.subr.mxu0 0.0
    %209 = vmatpush1.xpose.msra.mxu0 0.0
    %210 = vmatprep.subr.mxu0 0.0
    %211 = vmatpush1.xpose.msra.mxu0 0.0
    %212 = vmatprep.subr.mxu0 0.0
    %213 = vmatpush1.xpose.msra.mxu0 0.0
    %214 = vmatprep.subr.mxu0 0.0
    %215 = vmatpush1.xpose.msra.mxu0 0.0
    %216 = vmatprep.subr.mxu0 0.0
    %217 = vmatpush1.xpose.msra.mxu0 0.0
    %218 = vmatprep.subr.mxu0 0.0
    %219 = vmatpush1.xpose.msra.mxu0 0.0
    %220 = vmatprep.subr.mxu0 0.0
    %221 = vmatpush1.xpose.msra.mxu0 0.0
    %222 = vmatprep.subr.mxu0 0.0
    %223 = vmatpush1.xpose.msra.mxu0 0.0
    %224 = vmatprep.subr.mxu0 0.0
    %v225 = vand.u32 %v117, 4294901760
    %v226 = vsub.f32 %v117, %v225
    %v227 = vand.u32 %v226, 4294901760
    %v228 = vsub.f32 %v226, %v227
    %v229 = vand.u32 %v228, 4294901760
    %230 = vmatpush1.xpose.msra.mxu0 %v229
    %231 = vmatprep.subr.mxu0 0.0
    %232 = vmatpush2.xpose.msra.mxu0 0.0
    %233 = vmatprep.subr.mxu0 0.0
    %234 = vmatpush2.xpose.msra.mxu0 0.0
    %235 = vmatprep.subr.mxu0 0.0
    %236 = vmatpush2.xpose.msra.mxu0 0.0
    %237 = vmatprep.subr.mxu0 0.0
    %238 = vmatpush2.xpose.msra.mxu0 0.0
    %239 = vmatprep.subr.mxu0 0.0
    %240 = vmatpush2.xpose.msra.mxu0 0.0
    %241 = vmatprep.subr.mxu0 0.0
    %242 = vmatpush2.xpose.msra.mxu0 0.0
    %243 = vmatprep.subr.mxu0 0.0
    %244 = vmatpush2.xpose.msra.mxu0 0.0
    %245 = vmatprep.subr.mxu0 0.0
    %246 = vmatpush2.xpose.msra.mxu0 0.0
    %247 = vmatprep.subr.mxu0 0.0
    %248 = vmatpush2.xpose.msra.mxu0 0.0
    %249 = vmatprep.subr.mxu0 0.0
    %250 = vmatpush2.xpose.msra.mxu0 0.0
    %251 = vmatprep.subr.mxu0 0.0
    %252 = vmatpush2.xpose.msra.mxu0 0.0
    %253 = vmatprep.subr.mxu0 0.0
    %254 = vmatpush2.xpose.msra.mxu0 0.0
    %255 = vmatprep.subr.mxu0 0.0
    %256 = vmatpush2.xpose.msra.mxu0 0.0
    %257 = vmatprep.subr.mxu0 0.0
    %258 = vmatpush2.xpose.msra.mxu0 0.0
    %259 = vmatprep.subr.mxu0 0.0
    %260 = vmatpush2.xpose.msra.mxu0 0.0
    %261 = vmatprep.subr.mxu0 0.0
    %262 = vmatpush2.xpose.msra.mxu0 0.0
    %263 = vmatprep.mubr.f32.mxu0 0.0
    %v264 = vand.u32 %v109, 4294901760
    %265 = vmatmul.mubr.f32.gmra.mxu0 %v264
    %v266 = vpop.f32.mrf.mxu0
    %v267 = vadd.f32 %v191, %v266
    %v268 = vpop.f32.mrf.mxu0
    %269 = vdwg.mxu0
    %270 = vmatprep.subr.mxu0 0.0
    %271 = vmatpush1.xpose.msra.mxu0 0.0
    %272 = vmatprep.subr.mxu0 0.0
    %273 = vmatpush1.xpose.msra.mxu0 0.0
    %274 = vmatprep.subr.mxu0 0.0
    %275 = vmatpush1.xpose.msra.mxu0 0.0
    %276 = vmatprep.subr.mxu0 0.0
    %277 = vmatpush1.xpose.msra.mxu0 0.0
    %278 = vmatprep.subr.mxu0 0.0
    %279 = vmatpush1.xpose.msra.mxu0 0.0
    %280 = vmatprep.subr.mxu0 0.0
    %281 = vmatpush1.xpose.msra.mxu0 0.0
    %282 = vmatprep.subr.mxu0 0.0
    %283 = vmatpush1.xpose.msra.mxu0 0.0
    %284 = vmatprep.subr.mxu0 0.0
    %285 = vmatpush1.xpose.msra.mxu0 0.0
    %286 = vmatprep.subr.mxu0 0.0
    %287 = vmatpush1.xpose.msra.mxu0 0.0
    %288 = vmatprep.subr.mxu0 0.0
    %289 = vmatpush1.xpose.msra.mxu0 0.0
    %290 = vmatprep.subr.mxu0 0.0
    %291 = vmatpush1.xpose.msra.mxu0 0.0
    %292 = vmatprep.subr.mxu0 0.0
    %293 = vmatpush1.xpose.msra.mxu0 0.0
    %294 = vmatprep.subr.mxu0 0.0
    %295 = vmatpush1.xpose.msra.mxu0 0.0
    %296 = vmatprep.subr.mxu0 0.0
    %297 = vmatpush1.xpose.msra.mxu0 0.0
    %298 = vmatprep.subr.mxu0 0.0
    %299 = vmatpush1.xpose.msra.mxu0 0.0
    %300 = vmatprep.subr.mxu0 0.0
    %v301 = vand.u32 %v117, 4294901760
    %v302 = vsub.f32 %v117, %v301
    %303 = vmatpush1.xpose.msra.mxu0 %v302
    %304 = vmatprep.subr.mxu0 0.0
    %305 = vmatpush2.xpose.msra.mxu0 0.0
    %306 = vmatprep.subr.mxu0 0.0
    %307 = vmatpush2.xpose.msra.mxu0 0.0
    %308 = vmatprep.subr.mxu0 0.0
    %309 = vmatpush2.xpose.msra.mxu0 0.0
    %310 = vmatprep.subr.mxu0 0.0
    %311 = vmatpush2.xpose.msra.mxu0 0.0
    %312 = vmatprep.subr.mxu0 0.0
    %313 = vmatpush2.xpose.msra.mxu0 0.0
    %314 = vmatprep.subr.mxu0 0.0
    %315 = vmatpush2.xpose.msra.mxu0 0.0
    %316 = vmatprep.subr.mxu0 0.0
    %317 = vmatpush2.xpose.msra.mxu0 0.0
    %318 = vmatprep.subr.mxu0 0.0
    %319 = vmatpush2.xpose.msra.mxu0 0.0
    %320 = vmatprep.subr.mxu0 0.0
    %321 = vmatpush2.xpose.msra.mxu0 0.0
    %322 = vmatprep.subr.mxu0 0.0
    %323 = vmatpush2.xpose.msra.mxu0 0.0
    %324 = vmatprep.subr.mxu0 0.0
    %325 = vmatpush2.xpose.msra.mxu0 0.0
    %326 = vmatprep.subr.mxu0 0.0
    %327 = vmatpush2.xpose.msra.mxu0 0.0
    %328 = vmatprep.subr.mxu0 0.0
    %329 = vmatpush2.xpose.msra.mxu0 0.0
    %330 = vmatprep.subr.mxu0 0.0
    %331 = vmatpush2.xpose.msra.mxu0 0.0
    %332 = vmatprep.subr.mxu0 0.0
    %333 = vmatpush2.xpose.msra.mxu0 0.0
    %334 = vmatprep.subr.mxu0 0.0
    %335 = vmatpush2.xpose.msra.mxu0 0.0
    %336 = vmatprep.mubr.f32.mxu0 0.0
    %v337 = vand.u32 %v109, 4294901760
    %v338 = vsub.f32 %v109, %v337
    %339 = vmatmul.mubr.f32.gmra.mxu0 %v338
    %v340 = vpop.f32.mrf.mxu0
    %v341 = vadd.f32 %v267, %v340
    %v342 = vpop.f32.mrf.mxu0
    %343 = vdwg.mxu0
    %344 = vmatprep.subr.mxu0 0.0
    %345 = vmatpush1.xpose.msra.mxu0 0.0
    %346 = vmatprep.subr.mxu0 0.0
    %347 = vmatpush1.xpose.msra.mxu0 0.0
    %348 = vmatprep.subr.mxu0 0.0
    %349 = vmatpush1.xpose.msra.mxu0 0.0
    %350 = vmatprep.subr.mxu0 0.0
    %351 = vmatpush1.xpose.msra.mxu0 0.0
    %352 = vmatprep.subr.mxu0 0.0
    %353 = vmatpush1.xpose.msra.mxu0 0.0
    %354 = vmatprep.subr.mxu0 0.0
    %355 = vmatpush1.xpose.msra.mxu0 0.0
    %356 = vmatprep.subr.mxu0 0.0
    %357 = vmatpush1.xpose.msra.mxu0 0.0
    %358 = vmatprep.subr.mxu0 0.0
    %359 = vmatpush1.xpose.msra.mxu0 0.0
    %360 = vmatprep.subr.mxu0 0.0
    %361 = vmatpush1.xpose.msra.mxu0 0.0
    %362 = vmatprep.subr.mxu0 0.0
    %363 = vmatpush1.xpose.msra.mxu0 0.0
    %364 = vmatprep.subr.mxu0 0.0
    %365 = vmatpush1.xpose.msra.mxu0 0.0
    %366 = vmatprep.subr.mxu0 0.0
    %367 = vmatpush1.xpose.msra.mxu0 0.0
    %368 = vmatprep.subr.mxu0 0.0
    %369 = vmatpush1.xpose.msra.mxu0 0.0
    %370 = vmatprep.subr.mxu0 0.0
    %371 = vmatpush1.xpose.msra.mxu0 0.0
    %372 = vmatprep.subr.mxu0 0.0
    %373 = vmatpush1.xpose.msra.mxu0 0.0
    %374 = vmatprep.subr.mxu0 0.0
    %v375 = vand.u32 %v117, 4294901760
    %376 = vmatpush1.xpose.msra.mxu0 %v375
    %377 = vmatprep.subr.mxu0 0.0
    %378 = vmatpush2.xpose.msra.mxu0 0.0
    %379 = vmatprep.subr.mxu0 0.0
    %380 = vmatpush2.xpose.msra.mxu0 0.0
    %381 = vmatprep.subr.mxu0 0.0
    %382 = vmatpush2.xpose.msra.mxu0 0.0
    %383 = vmatprep.subr.mxu0 0.0
    %384 = vmatpush2.xpose.msra.mxu0 0.0
    %385 = vmatprep.subr.mxu0 0.0
    %386 = vmatpush2.xpose.msra.mxu0 0.0
    %387 = vmatprep.subr.mxu0 0.0
    %388 = vmatpush2.xpose.msra.mxu0 0.0
    %389 = vmatprep.subr.mxu0 0.0
    %390 = vmatpush2.xpose.msra.mxu0 0.0
    %391 = vmatprep.subr.mxu0 0.0
    %392 = vmatpush2.xpose.msra.mxu0 0.0
    %393 = vmatprep.subr.mxu0 0.0
    %394 = vmatpush2.xpose.msra.mxu0 0.0
    %395 = vmatprep.subr.mxu0 0.0
    %396 = vmatpush2.xpose.msra.mxu0 0.0
    %397 = vmatprep.subr.mxu0 0.0
    %398 = vmatpush2.xpose.msra.mxu0 0.0
    %399 = vmatprep.subr.mxu0 0.0
    %400 = vmatpush2.xpose.msra.mxu0 0.0
    %401 = vmatprep.subr.mxu0 0.0
    %402 = vmatpush2.xpose.msra.mxu0 0.0
    %403 = vmatprep.subr.mxu0 0.0
    %404 = vmatpush2.xpose.msra.mxu0 0.0
    %405 = vmatprep.subr.mxu0 0.0
    %406 = vmatpush2.xpose.msra.mxu0 0.0
    %407 = vmatprep.subr.mxu0 0.0
    %408 = vmatpush2.xpose.msra.mxu0 0.0
    %409 = vmatprep.mubr.f32.mxu0 0.0
    %v410 = vand.u32 %v109, 4294901760
    %v411 = vsub.f32 %v109, %v410
    %v412 = vand.u32 %v411, 4294901760
    %413 = vmatmul.mubr.f32.gmra.mxu0 %v412
    %v414 = vpop.f32.mrf.mxu0
    %v415 = vadd.f32 %v341, %v414
    %v416 = vpop.f32.mrf.mxu0
    %417 = vdwg.mxu0
    %418 = vmatprep.subr.mxu0 0.0
    %419 = vmatpush1.xpose.msra.mxu0 0.0
    %420 = vmatprep.subr.mxu0 0.0
    %421 = vmatpush1.xpose.msra.mxu0 0.0
    %422 = vmatprep.subr.mxu0 0.0
    %423 = vmatpush1.xpose.msra.mxu0 0.0
    %424 = vmatprep.subr.mxu0 0.0
    %425 = vmatpush1.xpose.msra.mxu0 0.0
    %426 = vmatprep.subr.mxu0 0.0
    %427 = vmatpush1.xpose.msra.mxu0 0.0
    %428 = vmatprep.subr.mxu0 0.0
    %429 = vmatpush1.xpose.msra.mxu0 0.0
    %430 = vmatprep.subr.mxu0 0.0
    %431 = vmatpush1.xpose.msra.mxu0 0.0
    %432 = vmatprep.subr.mxu0 0.0
    %433 = vmatpush1.xpose.msra.mxu0 0.0
    %434 = vmatprep.subr.mxu0 0.0
    %435 = vmatpush1.xpose.msra.mxu0 0.0
    %436 = vmatprep.subr.mxu0 0.0
    %437 = vmatpush1.xpose.msra.mxu0 0.0
    %438 = vmatprep.subr.mxu0 0.0
    %439 = vmatpush1.xpose.msra.mxu0 0.0
    %440 = vmatprep.subr.mxu0 0.0
    %441 = vmatpush1.xpose.msra.mxu0 0.0
    %442 = vmatprep.subr.mxu0 0.0
    %443 = vmatpush1.xpose.msra.mxu0 0.0
    %444 = vmatprep.subr.mxu0 0.0
    %445 = vmatpush1.xpose.msra.mxu0 0.0
    %446 = vmatprep.subr.mxu0 0.0
    %447 = vmatpush1.xpose.msra.mxu0 0.0
    %448 = vmatprep.subr.mxu0 0.0
    %v449 = vand.u32 %v117, 4294901760
    %v450 = vsub.f32 %v117, %v449
    %v451 = vand.u32 %v450, 4294901760
    %452 = vmatpush1.xpose.msra.mxu0 %v451
    %453 = vmatprep.subr.mxu0 0.0
    %454 = vmatpush2.xpose.msra.mxu0 0.0
    %455 = vmatprep.subr.mxu0 0.0
    %456 = vmatpush2.xpose.msra.mxu0 0.0
    %457 = vmatprep.subr.mxu0 0.0
    %458 = vmatpush2.xpose.msra.mxu0 0.0
    %459 = vmatprep.subr.mxu0 0.0
    %460 = vmatpush2.xpose.msra.mxu0 0.0
    %461 = vmatprep.subr.mxu0 0.0
    %462 = vmatpush2.xpose.msra.mxu0 0.0
    %463 = vmatprep.subr.mxu0 0.0
    %464 = vmatpush2.xpose.msra.mxu0 0.0
    %465 = vmatprep.subr.mxu0 0.0
    %466 = vmatpush2.xpose.msra.mxu0 0.0
    %467 = vmatprep.subr.mxu0 0.0
    %468 = vmatpush2.xpose.msra.mxu0 0.0
    %469 = vmatprep.subr.mxu0 0.0
    %470 = vmatpush2.xpose.msra.mxu0 0.0
    %471 = vmatprep.subr.mxu0 0.0
    %472 = vmatpush2.xpose.msra.mxu0 0.0
    %473 = vmatprep.subr.mxu0 0.0
    %474 = vmatpush2.xpose.msra.mxu0 0.0
    %475 = vmatprep.subr.mxu0 0.0
    %476 = vmatpush2.xpose.msra.mxu0 0.0
    %477 = vmatprep.subr.mxu0 0.0
    %478 = vmatpush2.xpose.msra.mxu0 0.0
    %479 = vmatprep.subr.mxu0 0.0
    %480 = vmatpush2.xpose.msra.mxu0 0.0
    %481 = vmatprep.subr.mxu0 0.0
    %482 = vmatpush2.xpose.msra.mxu0 0.0
    %483 = vmatprep.subr.mxu0 0.0
    %484 = vmatpush2.xpose.msra.mxu0 0.0
    %485 = vmatprep.mubr.f32.mxu0 0.0
    %v486 = vand.u32 %v109, 4294901760
    %487 = vmatmul.mubr.f32.gmra.mxu0 %v486
    %v488 = vpop.f32.mrf.mxu0
    %v489 = vadd.f32 %v415, %v488
    %v490 = vpop.f32.mrf.mxu0
    %491 = vdwg.mxu0
    %492 = vmatprep.subr.mxu0 0.0
    %493 = vmatpush1.xpose.msra.mxu0 0.0
    %494 = vmatprep.subr.mxu0 0.0
    %495 = vmatpush1.xpose.msra.mxu0 0.0
    %496 = vmatprep.subr.mxu0 0.0
    %497 = vmatpush1.xpose.msra.mxu0 0.0
    %498 = vmatprep.subr.mxu0 0.0
    %499 = vmatpush1.xpose.msra.mxu0 0.0
    %500 = vmatprep.subr.mxu0 0.0
    %501 = vmatpush1.xpose.msra.mxu0 0.0
    %502 = vmatprep.subr.mxu0 0.0
    %503 = vmatpush1.xpose.msra.mxu0 0.0
    %504 = vmatprep.subr.mxu0 0.0
    %505 = vmatpush1.xpose.msra.mxu0 0.0
    %506 = vmatprep.subr.mxu0 0.0
    %507 = vmatpush1.xpose.msra.mxu0 0.0
    %508 = vmatprep.subr.mxu0 0.0
    %509 = vmatpush1.xpose.msra.mxu0 0.0
    %510 = vmatprep.subr.mxu0 0.0
    %511 = vmatpush1.xpose.msra.mxu0 0.0
    %512 = vmatprep.subr.mxu0 0.0
    %513 = vmatpush1.xpose.msra.mxu0 0.0
    %514 = vmatprep.subr.mxu0 0.0
    %515 = vmatpush1.xpose.msra.mxu0 0.0
    %516 = vmatprep.subr.mxu0 0.0
    %517 = vmatpush1.xpose.msra.mxu0 0.0
    %518 = vmatprep.subr.mxu0 0.0
    %519 = vmatpush1.xpose.msra.mxu0 0.0
    %520 = vmatprep.subr.mxu0 0.0
    %521 = vmatpush1.xpose.msra.mxu0 0.0
    %522 = vmatprep.subr.mxu0 0.0
    %v523 = vand.u32 %v117, 4294901760
    %524 = vmatpush1.xpose.msra.mxu0 %v523
    %525 = vmatprep.subr.mxu0 0.0
    %526 = vmatpush2.xpose.msra.mxu0 0.0
    %527 = vmatprep.subr.mxu0 0.0
    %528 = vmatpush2.xpose.msra.mxu0 0.0
    %529 = vmatprep.subr.mxu0 0.0
    %530 = vmatpush2.xpose.msra.mxu0 0.0
    %531 = vmatprep.subr.mxu0 0.0
    %532 = vmatpush2.xpose.msra.mxu0 0.0
    %533 = vmatprep.subr.mxu0 0.0
    %534 = vmatpush2.xpose.msra.mxu0 0.0
    %535 = vmatprep.subr.mxu0 0.0
    %536 = vmatpush2.xpose.msra.mxu0 0.0
    %537 = vmatprep.subr.mxu0 0.0
    %538 = vmatpush2.xpose.msra.mxu0 0.0
    %539 = vmatprep.subr.mxu0 0.0
    %540 = vmatpush2.xpose.msra.mxu0 0.0
    %541 = vmatprep.subr.mxu0 0.0
    %542 = vmatpush2.xpose.msra.mxu0 0.0
    %543 = vmatprep.subr.mxu0 0.0
    %544 = vmatpush2.xpose.msra.mxu0 0.0
    %545 = vmatprep.subr.mxu0 0.0
    %546 = vmatpush2.xpose.msra.mxu0 0.0
    %547 = vmatprep.subr.mxu0 0.0
    %548 = vmatpush2.xpose.msra.mxu0 0.0
    %549 = vmatprep.subr.mxu0 0.0
    %550 = vmatpush2.xpose.msra.mxu0 0.0
    %551 = vmatprep.subr.mxu0 0.0
    %552 = vmatpush2.xpose.msra.mxu0 0.0
    %553 = vmatprep.subr.mxu0 0.0
    %554 = vmatpush2.xpose.msra.mxu0 0.0
    %555 = vmatprep.subr.mxu0 0.0
    %556 = vmatpush2.xpose.msra.mxu0 0.0
    %557 = vmatprep.mubr.f32.mxu0 0.0
    %v558 = vand.u32 %v109, 4294901760
    %559 = vmatmul.mubr.f32.gmra.mxu0 %v558
    %v560 = vpop.f32.mrf.mxu0
    %v561 = vadd.f32 %v489, %v560
    %v562 = vpop.f32.mrf.mxu0
    %563 = vdwg.mxu0
    %p564 = scmp.eq.s32.totalorder 0, 0
    // Predicated region
    $region30: #{tpu_custom_call.1} parent=1 // pred_check
      %p565 = pneg %p564
    $region31: #{tpu_custom_call.1} parent=1 // pred_check_branch
      %567 = sbr.rel (%p565) target = $region33
    $region32: #{tpu_custom_call.1} parent=1 // pred_region
      %vm568 = vcmask 64512
      %569 = vst.msk [vmem:[#allocation5] sm:$0xff] %vm568, 0.0
    $region33: #{tpu_custom_call.1} parent=1 // pred_fallthru
      _
    %v570 = vld [vmem:[#allocation5] sm:$0xff]
    %v571 = vadd.f32 %v570, %v561
    %vm572 = vcmask 64512
    %573 = vst.msk [vmem:[#allocation5] sm:$0xff] %vm572, %v571
    // Predicated region
    $region34: #{tpu_custom_call.1} parent=1 // pred_check
      _
    $region35: #{tpu_custom_call.1} parent=1 // pred_check_branch
      %575 = sbr.rel (0) target = $region37
    $region36: #{tpu_custom_call.1} parent=1 // pred_region
      %s577 = ssub.s32 128, 128
      %578 = vsyncadd [#allocation4], %s577
      %s580 = sshll.u32 [#allocation5], 4
      %s581 = int_to_ptr.vmem [resolvable:$true] %s580
      %583 = dma.vmem_to_hbm [thread:$0]  %s581, 128, %s6, [#allocation4]
    $region37: #{tpu_custom_call.1} parent=1 // pred_fallthru
      _
    // Predicated region
    $region38: #{tpu_custom_call.1} parent=1 // pred_check
      _
    $region39: #{tpu_custom_call.1} parent=1 // pred_check_branch
      %585 = sbr.rel (0) target = $region41
    $region40: #{tpu_custom_call.1} parent=1 // pred_region
      %586 = dma.done [#allocation4], 128
    $region41: #{tpu_custom_call.1} parent=1 // pred_fallthru
      _
    %587 = vsyncpa [#allocation3], 1
    %588 = vsyncpa [#allocation4], 1

</llo_original>
